<compile_context>
chip_gen: v6e
topology: v6e:2x2x1
jax: 0.10.0
libtpu: 0.0.40
codegen_flags: <defaults>
</compile_context>

<pallas_src>
import functools

import jax
import jax.numpy as jnp
from jax.experimental import pallas as pl
from jax.experimental.pallas import tpu as pltpu


def _round_up(v: int, m: int) -> int:
    return ((v + m - 1) // m) * m


def _pick_batch_tile(B: int, tb_cap: int):
    """Pick (tb, b_pad) with tb | b_pad, preferring no padding and >= 2 tiles."""
    if B % 8 == 0:
        cap = B // 2 if B >= 16 else B          # >= 2 tiles -> both v7x TensorCores busy
        cap = max(8, min(tb_cap, (cap // 8) * 8))
        for cand in range(cap, 0, -8):
            if B % cand == 0:
                return cand, B
    if B <= tb_cap:                             # small / ragged batch: one full-dim tile
        return B, B
    b_pad = _round_up(B, 8)
    tb = max(8, min(tb_cap, (b_pad // 8) * 8))
    while b_pad % tb != 0:
        tb -= 8
    return tb, b_pad


def _pick_channel_tile(C: int, tb: int, hw_lanes: int, itemsize: int, budget: int):
    """Pick (tc, c_pad) with tc | c_pad; prefers exact divisors of C (no padding)."""
    per_chan = max(1, tb * hw_lanes * itemsize)          # lane-padded bytes per channel
    max_tc8 = (budget // per_chan) // 8 * 8
    if C % 8 == 0:
        cap = max(8, min(C, max_tc8))
        for cand in range(cap, 0, -8):
            if C % cand == 0:
                return cand, C
        return 8, C
    # C not a multiple of 8: a single full-extent channel block is legal (== full dim).
    if _round_up(C, 8) * per_chan <= budget or C <= 8:
        return C, C
    c_pad = _round_up(C, 8)
    tc = max(8, min(c_pad, max_tc8))
    while c_pad % tc != 0:
        tc -= 8
    return tc, c_pad


def _cls_head_kernel(x_ref, w_ref, b_ref, o_ref, *, tc, w_resident):
    # x_ref : (TB, TC, HW)     one batch x channel tile, full spatial extent
    # w_ref : (C_pad, N_pad)   resident (weight.T / HW), f32   [or (TC, N_pad) if tiled]
    # b_ref : (1, N_pad)       bias, f32, zero-padded
    # o_ref : (TB, N_pad)      f32 logits; resident across the channel axis -> accumulator
    c = pl.program_id(1)

    @pl.when(c == 0)
    def _():
        o_ref[...] = jnp.broadcast_to(b_ref[...], o_ref.shape)

    # Global-average-pool partial: raw f32 sum over H*W (the 1/HW scale lives in W).
    pooled = jnp.sum(x_ref[...], axis=-1, dtype=jnp.float32)            # (TB, TC)

    if w_resident:
        start = pl.multiple_of(c * tc, tc)
        w_tile = w_ref[pl.ds(start, tc), :]                             # (TC, N_pad)
    else:
        w_tile = w_ref[...]

    o_ref[...] += jnp.dot(pooled, w_tile, preferred_element_type=jnp.float32)


def classification_head(x, weight, bias):
    """x: (B, C, H, W) NCHW; weight: (num_classes, C); bias: (num_classes,).
    Returns f32 logits of shape (B, num_classes)."""
    B, C, H, W = x.shape
    num_classes = weight.shape[0]
    HW = H * W
    itemsize = jnp.dtype(x.dtype).itemsize

    n_pad = _round_up(num_classes, 128)        # lane-dense class dim (unmasked vst)
    hw_lanes = _round_up(HW, 128)              # real lane footprint of the spatial axis

    # --- VMEM policy (hardware-aware, conservative on v7x's 64 MiB) ---
    try:
        vmem_phys = int(getattr(pltpu.get_tpu_info(), "vmem_capacity_bytes",
                                64 * 1024 * 1024))
    except Exception:
        vmem_phys = 64 * 1024 * 1024
    vmem_limit = max(32 * 1024 * 1024,
                     min(int(vmem_phys * 0.8), 100 * 1024 * 1024))

    # --- weight residency decision (based on minimally padded C) ---
    c_pad_min = C if C % 8 == 0 else _round_up(C, 8)
    w_bytes = c_pad_min * n_pad * 4
    w_resident = w_bytes <= min(16 * 1024 * 1024, vmem_limit // 3)

    # --- batch tile ---
    tb_cap = 128   # TODO(synk): bump to 256 on v6e (2x256x256 MXU) when B >= 512
    tb, b_pad = _pick_batch_tile(B, tb_cap)

    # --- x tile budget: 2 x-buffers + (conservatively 2x) W + out block + slack ---
    out_bytes = 2 * _round_up(tb, 8) * n_pad * 4
    reserved = (2 * w_bytes if w_resident else 0) + out_bytes + 4 * 1024 * 1024
    x_budget = max((vmem_limit - reserved) // 2, 2 * 1024 * 1024)

    # Guard: shrink tb if even an 8-channel slab at this tb blows the x budget.
    while tb > 8 and tb % 8 == 0 and tb * 8 * hw_lanes * itemsize > x_budget:
        new_tb = max(8, (tb // 2) // 8 * 8)
        if b_pad % new_tb != 0:
            break
        tb = new_tb
    # TODO(synk): add a spatial (H*W) reduction grid axis for very large feature maps
    # (e.g. 112x112) instead of relying on tiny channel tiles.

    tc, c_pad = _pick_channel_tile(C, tb, hw_lanes, itemsize, x_budget)

    # --- glue (no full activation copy unless a ragged pad is unavoidable) ---
    x_flat = x.reshape(B, C, HW)
    if b_pad != B or c_pad != C:
        x_flat = jnp.pad(x_flat, ((0, b_pad - B), (0, c_pad - C), (0, 0)))
    w_t = weight.T.astype(jnp.float32) / jnp.float32(HW)                 # (C, N)
    w_t = jnp.pad(w_t, ((0, c_pad - C), (0, n_pad - num_classes)))        # (C_pad, N_pad)
    b2 = jnp.pad(bias.reshape(1, num_classes).astype(jnp.float32),
                 ((0, 0), (0, n_pad - num_classes)))                      # (1, N_pad)

    grid = (b_pad // tb, c_pad // tc)

    if w_resident:
        try:
            w_spec = pl.BlockSpec((c_pad, n_pad), lambda b, c: (0, 0),
                                  pipeline_mode=pl.Buffered(1))
        except (TypeError, ValueError):   # signature without pipeline_mode / count guard
            w_spec = pl.BlockSpec((c_pad, n_pad), lambda b, c: (0, 0))
    else:
        w_spec = pl.BlockSpec((tc, n_pad), lambda b, c: (c, 0))

    kernel = functools.partial(_cls_head_kernel, tc=tc, w_resident=w_resident)

    out = pl.pallas_call(
        kernel,
        out_shape=jax.ShapeDtypeStruct((b_pad, n_pad), jnp.float32),
        grid_spec=pltpu.PrefetchScalarGridSpec(
            num_scalar_prefetch=0,
            grid=grid,
            in_specs=[
                pl.BlockSpec((tb, tc, HW), lambda b, c: (b, c, 0)),
                w_spec,
                pl.BlockSpec((1, n_pad), lambda b, c: (0, 0)),
            ],
            out_specs=pl.BlockSpec((tb, n_pad), lambda b, c: (b, 0)),
        ),
        compiler_params=pltpu.CompilerParams(
            dimension_semantics=("parallel", "arbitrary"),
            vmem_limit_bytes=int(vmem_limit),
        ),
    )(x_flat, w_t, b2)

    return out[:B, :num_classes]


def reference(x, weight, bias):
    pooled = jnp.mean(x.astype(jnp.float32), axis=(2, 3))               # (B, C)
    return pooled @ weight.astype(jnp.float32).T + bias.astype(jnp.float32)


if __name__ == "__main__":
    B, C, H, W = 2, 4, 16, 16
    num_classes = 10

    key = jax.random.PRNGKey(0)
    kx, kw, kb = jax.random.split(key, 3)

    x = jax.random.normal(kx, (B, C, H, W), dtype=jnp.float32)

    # Deterministic nn.Linear-style init: U(-1/sqrt(C), 1/sqrt(C))
    bound = 1.0 / jnp.sqrt(jnp.float32(C))
    weight = jax.random.uniform(kw, (num_classes, C), dtype=jnp.float32,
                                minval=-bound, maxval=bound)
    bias = jax.random.uniform(kb, (num_classes,), dtype=jnp.float32,
                              minval=-bound, maxval=bound)

    out = classification_head(x, weight, bias)
    jax.block_until_ready(out)

    ref = reference(x, weight, bias)
    assert out.shape == (B, num_classes)
    assert jnp.allclose(out, ref, atol=1e-5, rtol=1e-5), "mismatch vs reference"

    print("KERNEL_OK")
</pallas_src>

<mosaic_0001>
module attributes {stable_mosaic.version = 11 : i64} {
  func.func @_cls_head_kernel(%arg0: i32, %arg1: i32, %arg2: memref<2x4x256xf32, #tpu.memory_space<vmem>>, %arg3: memref<4x128xf32, #tpu.memory_space<vmem>>, %arg4: memref<1x128xf32, #tpu.memory_space<vmem>>, %arg5: memref<2x128xf32, #tpu.memory_space<vmem>>) attributes {dimension_semantics = [#tpu.dimension_semantics<parallel>, #tpu.dimension_semantics<arbitrary>], iteration_bounds = array<i64: 1, 1>, scalar_prefetch = 0 : i64, scratch_operands = 0 : i64, tpu.core_type = #tpu.core_type<tc>, window_params = [{transform_indices = @transform_0, window_bounds = array<i64: 2, 4, 256>}, {pipeline_mode = #tpu.pipeline_mode<synchronous>, transform_indices = @transform_1, window_bounds = array<i64: 4, 128>}, {pipeline_mode = #tpu.pipeline_mode<synchronous>, transform_indices = @transform_2, window_bounds = array<i64: 1, 128>}, {transform_indices = @transform_3, window_bounds = array<i64: 2, 128>}]} {
    %c0_i32 = arith.constant 0 : i32
    %0 = arith.cmpi eq, %arg1, %c0_i32 : i32
    %1 = arith.extui %0 : i1 to i32
    %c0_i32_0 = arith.constant 0 : i32
    %2 = arith.cmpi ne, %1, %c0_i32_0 : i32
    scf.if %2 {
      %c0_9 = arith.constant 0 : index
      %c0_10 = arith.constant 0 : index
      %13 = vector.load %arg4[%c0_9, %c0_10] : memref<1x128xf32, #tpu.memory_space<vmem>>, vector<1x128xf32>
      %14 = vector.shape_cast %13 : vector<1x128xf32> to vector<1x128xf32>
      %15 = vector.broadcast %14 : vector<1x128xf32> to vector<2x128xf32>
      %c0_11 = arith.constant 0 : index
      %c0_12 = arith.constant 0 : index
      %16 = vector.load %arg5[%c0_11, %c0_12] : memref<2x128xf32, #tpu.memory_space<vmem>>, vector<2x128xf32>
      tpu.vector_store %arg5[%c0_11, %c0_12], %15 {strides = array<i32>} : memref<2x128xf32, #tpu.memory_space<vmem>>, vector<2x128xf32>,
    } else {
    }
    %c0 = arith.constant 0 : index
    %c0_1 = arith.constant 0 : index
    %c0_2 = arith.constant 0 : index
    %3 = vector.load %arg2[%c0, %c0_1, %c0_2] : memref<2x4x256xf32, #tpu.memory_space<vmem>>, vector<2x4x256xf32>
    %cst = arith.constant dense<0.000000e+00> : vector<2x4xf32>
    %4 = vector.multi_reduction <add>, %3, %cst [2] : vector<2x4x256xf32> to vector<2x4xf32>
    %c4_i32 = arith.constant 4 : i32
    %5 = arith.muli %arg1, %c4_i32 : i32
    %6 = tpu.assume_multiple %5, 4 : i32
    %7 = arith.index_cast %6 : i32 to index
    %c0_3 = arith.constant 0 : index
    %8 = vector.load %arg3[%7, %c0_3] : memref<4x128xf32, #tpu.memory_space<vmem>>, vector<4x128xf32>
    %c0_4 = arith.constant 0 : index
    %c0_5 = arith.constant 0 : index
    %9 = vector.load %arg5[%c0_4, %c0_5] : memref<2x128xf32, #tpu.memory_space<vmem>>, vector<2x128xf32>
    %cst_6 = arith.constant dense<0.000000e+00> : vector<2x128xf32>
    %10 = tpu.matmul %4, %8, %cst_6 {dimension_numbers = #tpu.dot_dimension_numbers<[1], [0], [0], [1], [0, 0, 1, 1], [], []>} : vector<2x4xf32>, vector<4x128xf32>, vector<2x128xf32> -> vector<2x128xf32>
    %11 = arith.addf %9, %10 : vector<2x128xf32>
    %c0_7 = arith.constant 0 : index
    %c0_8 = arith.constant 0 : index
    %12 = vector.load %arg5[%c0_7, %c0_8] : memref<2x128xf32, #tpu.memory_space<vmem>>, vector<2x128xf32>
    tpu.vector_store %arg5[%c0_7, %c0_8], %11 {strides = array<i32>} : memref<2x128xf32, #tpu.memory_space<vmem>>, vector<2x128xf32>,
    return
  }
  func.func @transform_0(%arg0: i32, %arg1: i32) -> (i32, i32, i32) {
    %c0_i32 = arith.constant 0 : i32
    %c0_i32_0 = arith.constant 0 : i32
    return %arg0, %arg1, %c0_i32 : i32, i32, i32
  }
  func.func @transform_1(%arg0: i32, %arg1: i32) -> (i32, i32) {
    %c0_i32 = arith.constant 0 : i32
    %c0_i32_0 = arith.constant 0 : i32
    %c0_i32_1 = arith.constant 0 : i32
    return %c0_i32, %c0_i32_0 : i32, i32
  }
  func.func @transform_2(%arg0: i32, %arg1: i32) -> (i32, i32) {
    %c0_i32 = arith.constant 0 : i32
    %c0_i32_0 = arith.constant 0 : i32
    %c0_i32_1 = arith.constant 0 : i32
    return %c0_i32, %c0_i32_0 : i32, i32
  }
  func.func @transform_3(%arg0: i32, %arg1: i32) -> (i32, i32) {
    %c0_i32 = arith.constant 0 : i32
    %c0_i32_0 = arith.constant 0 : i32
    return %arg0, %c0_i32 : i32, i32
  }
}

</mosaic_0001>

<llo_original>
// kernel: tpu_custom_call.1
$region0: #{tpu_custom_call.1}
  #allocation0 [shape = 'u32[]', space=smem, size = 0x4, offset = 0x4, fixed_abs, tag = 'smem constant byte address 0x4 - core index']
  #allocation1 [shape = 'u32[144,128]{1,0:T(1,128)}', space=vmem, size = 0x12000, scoped, tag = 'internal scratch']
  %s0 = inlined_call_operand.hbm [shape: f32[2,4,256], index: 0, kind: input, shape index: {}]
  %s1 = inlined_call_operand.hbm [shape: f32[4,128], index: 1, kind: input, shape index: {}]
  %s2 = inlined_call_operand.vmem [shape: f32[1,128], index: 2, kind: input, shape index: {}]
  %s3 = inlined_call_operand.hbm [shape: f32[2,128], index: 3, kind: output, shape index: {}]
  %s4 = sld [smem:[#allocation0]]
  $region34: #{tpu_custom_call.1} parent=0
    _
  %s6 = ssub.s32 1, %s4
  %s7 = scalar_select 0, %s6, %s4
  $region1: #{tpu_custom_call.1} parent=0
    #allocation2 [shape = 'u8[8192]{0}', space=vmem, size = 0x2000, scoped, tag = 'input window, operand 0, single buffered']
    #allocation3 [shape = 's32[1]{0}', space=sflag, size = 0x4, scoped, tag = 'scoped memory for tpu_custom_call.1']
    #allocation4 [shape = 's32[1]{0}', space=sflag, size = 0x4, scoped, tag = 'scoped memory for tpu_custom_call.1']
    #allocation5 [shape = 'u8[2048]{0}', space=vmem, size = 0x800, scoped, tag = 'input window, operand 1, single buffered']
    #allocation6 [shape = 's32[1]{0}', space=sflag, size = 0x4, scoped, tag = 'scoped memory for tpu_custom_call.1']
    #allocation7 [shape = 'u8[1024]{0}', space=vmem, size = 0x400, scoped, tag = 'output window, operand 0, single buffered']
    %8 = vsyncpa [#allocation3], 0
    %9 = vsyncpa [#allocation6], 0
    %10 = vsyncpa [#allocation4], 0
    // Predicated region
    $region2: #{tpu_custom_call.1} parent=1 // pred_check
      _
    $region3: #{tpu_custom_call.1} parent=1 // pred_check_branch
      %12 = sbr.rel (0) target = $region5
    $region4: #{tpu_custom_call.1} parent=1 // pred_region
      %s14 = ssub.s32 256, 256
      %15 = vsyncadd [#allocation3], %s14
      %s16 = sshll.u32 [#allocation2], 4
      %s17 = int_to_ptr.vmem [resolvable:$true] %s16
      %22 = dma.hbm_to_vmem [thread:$0]  %s0, 256, %s17, [#allocation3], 128, 128, 8
    $region5: #{tpu_custom_call.1} parent=1 // pred_fallthru
      _
    // Predicated region
    $region6: #{tpu_custom_call.1} parent=1 // pred_check
      _
    $region7: #{tpu_custom_call.1} parent=1 // pred_check_branch
      %24 = sbr.rel (0) target = $region9
    $region8: #{tpu_custom_call.1} parent=1 // pred_region
      %s26 = ssub.s32 64, 64
      %27 = vsyncadd [#allocation6], %s26
      %s29 = sshll.u32 [#allocation5], 4
      %s30 = int_to_ptr.vmem [resolvable:$true] %s29
      %32 = dma.hbm_to_vmem [thread:$0]  %s1, 64, %s30, [#allocation6]
    $region9: #{tpu_custom_call.1} parent=1 // pred_fallthru
      _
    // Predicated region
    $region10: #{tpu_custom_call.1} parent=1 // pred_check
      _
    $region11: #{tpu_custom_call.1} parent=1 // pred_check_branch
      %34 = sbr.rel (0) target = $region13
    $region12: #{tpu_custom_call.1} parent=1 // pred_region
      _
    $region13: #{tpu_custom_call.1} parent=1 // pred_fallthru
      _
    // Predicated region
    $region14: #{tpu_custom_call.1} parent=1 // pred_check
      _
    $region15: #{tpu_custom_call.1} parent=1 // pred_check_branch
      %36 = sbr.rel (0) target = $region17
    $region16: #{tpu_custom_call.1} parent=1 // pred_region
      %37 = dma.done [#allocation3], 256
    $region17: #{tpu_custom_call.1} parent=1 // pred_fallthru
      _
    // Predicated region
    $region18: #{tpu_custom_call.1} parent=1 // pred_check
      _
    $region19: #{tpu_custom_call.1} parent=1 // pred_check_branch
      %39 = sbr.rel (0) target = $region21
    $region20: #{tpu_custom_call.1} parent=1 // pred_region
      %40 = dma.done [#allocation6], 64
    $region21: #{tpu_custom_call.1} parent=1 // pred_fallthru
      _
    %p41 = scmp.eq.s32.totalorder 0, 0
    // Predicated region
    $region22: #{tpu_custom_call.1} parent=1 // pred_check
      %p42 = pneg %p41
    $region23: #{tpu_custom_call.1} parent=1 // pred_check_branch
      %44 = sbr.rel (%p42) target = $region25
    $region24: #{tpu_custom_call.1} parent=1 // pred_region
      %v45 = vld [vmem:[%s2] sm:$0x1]
      %v47 = vlaneseq
      %v48 = vshrl.u32 %v47, 7
      %v49 = vsub.s32 0, %v48
      %v50 = vrot.slane %v45, %v49
      %52 = vst [vmem:[#allocation7] sm:$0x3] %v50
    $region25: #{tpu_custom_call.1} parent=1 // pred_fallthru
      _
    %v53 = vld [vmem:[#allocation2] sm:$0xff]
    %v54 = vld [vmem:[#allocation2 + $0x8] sm:$0xff]
    %v57 = vcombine.high %v53, %v53
    %v58 = vcombine.high %v54, %v54
    %vm61 = vcmask 1043456
    %v62 = vsel %vm61, %v53, 0.0
    %v63 = vsel %vm61, %v57, 0.0
    %v64 = vadd.f32 %v62, %v63
    %65 = vadd.xlane.f32.xlu0 %v64
    %v66 = vpop.xlane.xlu0 %65
    %v67 = vsel %vm61, %v54, 0.0
    %v68 = vsel %vm61, %v58, 0.0
    %v69 = vadd.f32 %v67, %v68
    %70 = vadd.xlane.f32.xlu0 %v69
    %v71 = vpop.xlane.xlu0 %70
    %s72 = smul.u32 0, 4
    %s73 = scalar_lea.vmem [#allocation5], %s72
    %v74 = vld [vmem:[%s73] sm:$0xf]
    %v75 = vld [vmem:[#allocation7] sm:$0x3]
    %v78 = vlaneseq
    %v79 = vand.u32 %v78, 127
    %v80 = vlaneseq
    %v81 = vshrl.u32 %v80, 7
    %v82 = vsub.s32 %v79, %v81
    %v83 = vrot.slane %v66, %v82
    %v84 = vlaneseq
    %v85 = vshrl.u32 %v84, 7
    %v86 = vsub.s32 %v79, %v85
    %v87 = vrot.slane %v71, %v86
    %vm88 = vcmask 1041409
    %v89 = vsel %vm88, %v87, %v83
    %vm90 = vcmask 31744
    %v91 = vsel %vm90, %v89, 0
    %v94 = vsel %vm61, %v74, 0
    %96 = vmatprep.subr.mxu0 0.0
    %97 = vmatpush1.msra.mxu0 0.0
    %98 = vmatprep.subr.mxu0 0.0
    %99 = vmatpush1.msra.mxu0 0.0
    %100 = vmatprep.subr.mxu0 0.0
    %101 = vmatpush1.msra.mxu0 0.0
    %102 = vmatprep.subr.mxu0 0.0
    %103 = vmatpush1.msra.mxu0 0.0
    %104 = vmatprep.subr.mxu0 0.0
    %105 = vmatpush1.msra.mxu0 0.0
    %106 = vmatprep.subr.mxu0 0.0
    %107 = vmatpush1.msra.mxu0 0.0
    %108 = vmatprep.subr.mxu0 0.0
    %109 = vmatpush1.msra.mxu0 0.0
    %110 = vmatprep.subr.mxu0 0.0
    %111 = vmatpush1.msra.mxu0 0.0
    %112 = vmatprep.subr.mxu0 0.0
    %113 = vmatpush1.msra.mxu0 0.0
    %114 = vmatprep.subr.mxu0 0.0
    %115 = vmatpush1.msra.mxu0 0.0
    %116 = vmatprep.subr.mxu0 0.0
    %117 = vmatpush1.msra.mxu0 0.0
    %118 = vmatprep.subr.mxu0 0.0
    %119 = vmatpush1.msra.mxu0 0.0
    %120 = vmatprep.subr.mxu0 0.0
    %121 = vmatpush1.msra.mxu0 0.0
    %122 = vmatprep.subr.mxu0 0.0
    %123 = vmatpush1.msra.mxu0 0.0
    %124 = vmatprep.subr.mxu0 0.0
    %125 = vmatpush1.msra.mxu0 0.0
    %126 = vmatprep.subr.mxu0 0.0
    %127 = vmatpush1.msra.mxu0 %v94
    %128 = vmatprep.subr.mxu0 0.0
    %129 = vmatpush2.msra.mxu0 0.0
    %130 = vmatprep.subr.mxu0 0.0
    %131 = vmatpush2.msra.mxu0 0.0
    %132 = vmatprep.subr.mxu0 0.0
    %133 = vmatpush2.msra.mxu0 0.0
    %134 = vmatprep.subr.mxu0 0.0
    %135 = vmatpush2.msra.mxu0 0.0
    %136 = vmatprep.subr.mxu0 0.0
    %137 = vmatpush2.msra.mxu0 0.0
    %138 = vmatprep.subr.mxu0 0.0
    %139 = vmatpush2.msra.mxu0 0.0
    %140 = vmatprep.subr.mxu0 0.0
    %141 = vmatpush2.msra.mxu0 0.0
    %142 = vmatprep.subr.mxu0 0.0
    %143 = vmatpush2.msra.mxu0 0.0
    %144 = vmatprep.subr.mxu0 0.0
    %145 = vmatpush2.msra.mxu0 0.0
    %146 = vmatprep.subr.mxu0 0.0
    %147 = vmatpush2.msra.mxu0 0.0
    %148 = vmatprep.subr.mxu0 0.0
    %149 = vmatpush2.msra.mxu0 0.0
    %150 = vmatprep.subr.mxu0 0.0
    %151 = vmatpush2.msra.mxu0 0.0
    %152 = vmatprep.subr.mxu0 0.0
    %153 = vmatpush2.msra.mxu0 0.0
    %154 = vmatprep.subr.mxu0 0.0
    %155 = vmatpush2.msra.mxu0 0.0
    %156 = vmatprep.subr.mxu0 0.0
    %157 = vmatpush2.msra.mxu0 0.0
    %158 = vmatprep.subr.mxu0 0.0
    %159 = vmatpush2.msra.mxu0 0.0
    %160 = vmatprep.mubr.f32.mxu0 0.0
    %161 = vmatmul.mubr.f32.gmra.mxu0 %v91
    %v162 = vpop.f32.mrf.mxu0
    %v163 = vadd.f32 0.0, %v162
    %v164 = vpop.f32.mrf.mxu0
    %165 = vdwg.mxu0
    %v166 = vadd.f32 %v75, %v163
    %167 = vst [vmem:[#allocation7] sm:$0x3] %v166
    // Predicated region
    $region26: #{tpu_custom_call.1} parent=1 // pred_check
      _
    $region27: #{tpu_custom_call.1} parent=1 // pred_check_branch
      %169 = sbr.rel (0) target = $region29
    $region28: #{tpu_custom_call.1} parent=1 // pred_region
      %s171 = ssub.s32 32, 32
      %172 = vsyncadd [#allocation4], %s171
      %s174 = sshll.u32 [#allocation7], 4
      %s175 = int_to_ptr.vmem [resolvable:$true] %s174
      %177 = dma.vmem_to_hbm [thread:$0]  %s175, 32, %s3, [#allocation4]
    $region29: #{tpu_custom_call.1} parent=1 // pred_fallthru
      _
    // Predicated region
    $region30: #{tpu_custom_call.1} parent=1 // pred_check
      _
    $region31: #{tpu_custom_call.1} parent=1 // pred_check_branch
      %179 = sbr.rel (0) target = $region33
    $region32: #{tpu_custom_call.1} parent=1 // pred_region
      %180 = dma.done [#allocation4], 32
    $region33: #{tpu_custom_call.1} parent=1 // pred_fallthru
      _
    %181 = vsyncpa [#allocation3], 1
    %182 = vsyncpa [#allocation6], 1
    %183 = vsyncpa [#allocation4], 1

</llo_original>
